<compile_context>
chip_gen: v6e
topology: v6e:2x2x1
jax: 0.10.0
libtpu: 0.0.40
codegen_flags: <defaults>
</compile_context>

<pallas_src>
import jax
import jax.numpy as jnp
from jax.experimental import pallas as pl
from jax.experimental.pallas import tpu as pltpu


def resnet_block_kernel(x_ref, b1_ref, b2_ref, out_ref):
    # x_ref / out_ref : (H, N*W*C) f32   rows = h, lanes = (n, w, c)
    # b1_ref / b2_ref : (3*N*W*C, N*W*C) stacked block-diagonal band weights
    x = x_ref[...]
    h_dim = x.shape[0]
    row = jax.lax.broadcasted_iota(jnp.int32, x.shape, 0)
    is_top = row == 0
    is_bot = row == (h_dim - 1)

    def conv3x3(v, b_ref):
        # v[h-1] (zero at h==0) and v[h+1] (zero at h==H-1): sublane roll + mask.
        up = jnp.where(is_top, 0.0, pltpu.roll(v, shift=1, axis=0))
        dn = jnp.where(is_bot, 0.0, pltpu.roll(v, shift=h_dim - 1, axis=0))
        lhs = jnp.concatenate([up, v, dn], axis=1)            # (H, 3*L)
        return jnp.dot(lhs, b_ref[...],
                       preferred_element_type=jnp.float32)    # (H, L)

    out1 = jnp.maximum(conv3x3(x, b1_ref), 0.0)   # conv1 (pad=1, no bias) + ReLU
    out2 = conv3x3(out1, b2_ref)                  # conv2 (pad=1, no bias)
    out_ref[...] = jnp.maximum(out2 + x, 0.0).astype(out_ref.dtype)


def _band_matrices(w_oihw, width):
    """PyTorch (Cout, Cin, 3, 3) conv weight -> (3, W*Cin, W*Cout) banded mats.

    B[ky, wi*Cin + ci, wo*Cout + co] = w[co, ci, ky, wi - wo + 1] if |wi-wo|<=1,
    so (input_row @ B[ky]) is kernel-row ky's contribution to an output row,
    with the W boundary (padding=1) handled by the band validity mask.
    """
    cout, cin, kh, kw = w_oihw.shape
    wk = jnp.transpose(w_oihw, (2, 3, 1, 0)).astype(jnp.float32)  # (ky, kx, ci, co)
    wi = jnp.arange(width)[:, None]
    wo = jnp.arange(width)[None, :]
    kx = wi - wo + 1                                   # (W, W)
    valid = ((kx >= 0) & (kx < kw)).astype(jnp.float32)
    kx_c = jnp.clip(kx, 0, kw - 1)
    blocks = wk[:, kx_c] * valid[None, :, :, None, None]   # (3, W, W, Cin, Cout)
    return jnp.transpose(blocks, (0, 1, 3, 2, 4)).reshape(
        kh, width * cin, width * cout)


def _stacked_blockdiag_weights(w_oihw, n, width):
    """(3, W*C, W*C) band -> block-diagonal over the N images packed into the
    lane dim, stacked over the 3 kernel rows -> (3*N*W*C, N*W*C)."""
    band = _band_matrices(w_oihw, width)                    # (3, WC, WC)
    wc = band.shape[1]
    eye_n = jnp.eye(n, dtype=jnp.float32)
    big = jnp.einsum('nm,kij->knimj', eye_n, band)          # (3, N, WC, N, WC)
    l = n * wc
    return big.reshape(3 * l, l)


def resnet_block(x_nchw, w1_oihw, w2_oihw):
    """x_nchw: (N, C, H, W) f32; weights: (C, C, 3, 3) PyTorch conv layout."""
    N, C, H, W = x_nchw.shape
    L = N * W * C

    # glue: NCHW -> (H, N*W*C) lane-dense slab (rows = h, lanes = (n, w, c))
    x = jnp.transpose(x_nchw, (2, 0, 3, 1)).reshape(H, L)
    b1 = _stacked_blockdiag_weights(w1_oihw, N, W)
    b2 = _stacked_blockdiag_weights(w2_oihw, N, W)

    out_flat = pl.pallas_call(
        resnet_block_kernel,
        out_shape=jax.ShapeDtypeStruct((H, L), x.dtype),
        in_specs=[
            pl.BlockSpec(memory_space=pltpu.MemorySpace.VMEM),
            pl.BlockSpec(memory_space=pltpu.MemorySpace.VMEM),
            pl.BlockSpec(memory_space=pltpu.MemorySpace.VMEM),
        ],
        out_specs=pl.BlockSpec(memory_space=pltpu.MemorySpace.VMEM),
    )(x, b1, b2)

    return jnp.transpose(out_flat.reshape(H, N, W, C), (1, 3, 0, 2))  # NCHW


def _reference(x_nchw, w1_torch, w2_torch):
    dn = jax.lax.conv_dimension_numbers(x_nchw.shape, w1_torch.shape,
                                        ("NCHW", "OIHW", "NCHW"))
    conv = lambda x, w: jax.lax.conv_general_dilated(
        x, w, window_strides=(1, 1), padding=((1, 1), (1, 1)),
        dimension_numbers=dn)
    out = jax.nn.relu(conv(x_nchw, w1_torch))
    out = conv(out, w2_torch)
    return jax.nn.relu(out + x_nchw)


if __name__ == "__main__":
    num_filters = 4
    N, H, W = 2, 16, 16

    key = jax.random.PRNGKey(0)
    kx, k1, k2 = jax.random.split(key, 3)
    x = jax.random.normal(kx, (N, num_filters, H, W), dtype=jnp.float32)
    w1 = 0.1 * jax.random.normal(k1, (num_filters, num_filters, 3, 3),
                                 dtype=jnp.float32)
    w2 = 0.1 * jax.random.normal(k2, (num_filters, num_filters, 3, 3),
                                 dtype=jnp.float32)

    out = jax.block_until_ready(resnet_block(x, w1, w2))

    ref = _reference(x, w1, w2)
    assert out.shape == (N, num_filters, H, W)
    assert jnp.allclose(out, ref, atol=1e-4, rtol=1e-4), "mismatch vs reference conv"
    print("KERNEL_OK")
</pallas_src>

<mosaic_0001>
module attributes {stable_mosaic.version = 11 : i64} {
  func.func @resnet_block_kernel(%arg0: memref<16x128xf32, #tpu.memory_space<vmem>>, %arg1: memref<384x128xf32, #tpu.memory_space<vmem>>, %arg2: memref<384x128xf32, #tpu.memory_space<vmem>>, %arg3: memref<16x128xf32, #tpu.memory_space<vmem>>) attributes {dimension_semantics = [], scalar_prefetch = 0 : i64, scratch_operands = 0 : i64, tpu.core_type = #tpu.core_type<tc>} {
    %c0 = arith.constant 0 : index
    %c0_0 = arith.constant 0 : index
    %0 = vector.load %arg0[%c0, %c0_0] : memref<16x128xf32, #tpu.memory_space<vmem>>, vector<16x128xf32>
    %1 = tpu.iota {dimensions = array<i32: 0>} : vector<16x128xi32>
    %c0_i32 = arith.constant 0 : i32
    %2 = vector.broadcast %c0_i32 : i32 to vector<16x128xi32>
    %3 = arith.cmpi eq, %1, %2 : vector<16x128xi32>
    %c15_i32 = arith.constant 15 : i32
    %4 = vector.broadcast %c15_i32 : i32 to vector<16x128xi32>
    %5 = arith.cmpi eq, %1, %4 : vector<16x128xi32>
    %c1_i32 = arith.constant 1 : i32
    %6 = tpu.dynamic_rotate %0 by %c1_i32 dim 0 : vector<16x128xf32>, i32 -> vector<16x128xf32>
    %cst = arith.constant 0.000000e+00 : f32
    %7 = vector.broadcast %cst : f32 to vector<16x128xf32>
    %8 = arith.select %3, %7, %6 : vector<16x128xi1>, vector<16x128xf32>
    %c15_i32_1 = arith.constant 15 : i32
    %9 = tpu.dynamic_rotate %0 by %c15_i32_1 dim 0 : vector<16x128xf32>, i32 -> vector<16x128xf32>
    %cst_2 = arith.constant 0.000000e+00 : f32
    %10 = vector.broadcast %cst_2 : f32 to vector<16x128xf32>
    %11 = arith.select %5, %10, %9 : vector<16x128xi1>, vector<16x128xf32>
    %12 = tpu.concatenate %8, %0, %11 in 1 : vector<16x128xf32>, vector<16x128xf32>, vector<16x128xf32> -> vector<16x384xf32>
    %c0_3 = arith.constant 0 : index
    %c0_4 = arith.constant 0 : index
    %13 = vector.load %arg1[%c0_3, %c0_4] : memref<384x128xf32, #tpu.memory_space<vmem>>, vector<384x128xf32>
    %cst_5 = arith.constant dense<0.000000e+00> : vector<16x128xf32>
    %14 = tpu.matmul %12, %13, %cst_5 {dimension_numbers = #tpu.dot_dimension_numbers<[1], [0], [0], [1], [0, 0, 1, 1], [], []>} : vector<16x384xf32>, vector<384x128xf32>, vector<16x128xf32> -> vector<16x128xf32>
    %cst_6 = arith.constant 0.000000e+00 : f32
    %15 = vector.broadcast %cst_6 : f32 to vector<16x128xf32>
    %16 = arith.maximumf %14, %15 : vector<16x128xf32>
    %c1_i32_7 = arith.constant 1 : i32
    %17 = tpu.dynamic_rotate %16 by %c1_i32_7 dim 0 : vector<16x128xf32>, i32 -> vector<16x128xf32>
    %cst_8 = arith.constant 0.000000e+00 : f32
    %18 = vector.broadcast %cst_8 : f32 to vector<16x128xf32>
    %19 = arith.select %3, %18, %17 : vector<16x128xi1>, vector<16x128xf32>
    %c15_i32_9 = arith.constant 15 : i32
    %20 = tpu.dynamic_rotate %16 by %c15_i32_9 dim 0 : vector<16x128xf32>, i32 -> vector<16x128xf32>
    %cst_10 = arith.constant 0.000000e+00 : f32
    %21 = vector.broadcast %cst_10 : f32 to vector<16x128xf32>
    %22 = arith.select %5, %21, %20 : vector<16x128xi1>, vector<16x128xf32>
    %23 = tpu.concatenate %19, %16, %22 in 1 : vector<16x128xf32>, vector<16x128xf32>, vector<16x128xf32> -> vector<16x384xf32>
    %c0_11 = arith.constant 0 : index
    %c0_12 = arith.constant 0 : index
    %24 = vector.load %arg2[%c0_11, %c0_12] : memref<384x128xf32, #tpu.memory_space<vmem>>, vector<384x128xf32>
    %cst_13 = arith.constant dense<0.000000e+00> : vector<16x128xf32>
    %25 = tpu.matmul %23, %24, %cst_13 {dimension_numbers = #tpu.dot_dimension_numbers<[1], [0], [0], [1], [0, 0, 1, 1], [], []>} : vector<16x384xf32>, vector<384x128xf32>, vector<16x128xf32> -> vector<16x128xf32>
    %26 = arith.addf %25, %0 : vector<16x128xf32>
    %cst_14 = arith.constant 0.000000e+00 : f32
    %27 = vector.broadcast %cst_14 : f32 to vector<16x128xf32>
    %28 = arith.maximumf %26, %27 : vector<16x128xf32>
    %c0_15 = arith.constant 0 : index
    %c0_16 = arith.constant 0 : index
    %29 = vector.load %arg3[%c0_15, %c0_16] : memref<16x128xf32, #tpu.memory_space<vmem>>, vector<16x128xf32>
    tpu.vector_store %arg3[%c0_15, %c0_16], %28 {strides = array<i32>} : memref<16x128xf32, #tpu.memory_space<vmem>>, vector<16x128xf32>,
    return
  }
}

</mosaic_0001>

<llo_original>
// kernel: tpu_custom_call.1
$region0: #{tpu_custom_call.1}
  #allocation0 [shape = 'u32[]', space=smem, size = 0x4, offset = 0x4, fixed_abs, tag = 'smem constant byte address 0x4 - core index']
  #allocation1 [shape = 'u32[144,128]{1,0:T(1,128)}', space=vmem, size = 0x12000, scoped, tag = 'internal scratch']
  %s0 = inlined_call_operand.hbm [shape: f32[16,128], index: 0, kind: input, shape index: {}]
  %s1 = inlined_call_operand.hbm [shape: f32[384,128], index: 1, kind: input, shape index: {}]
  %s2 = inlined_call_operand.hbm [shape: f32[384,128], index: 2, kind: input, shape index: {}]
  %s3 = inlined_call_operand.hbm [shape: f32[16,128], index: 3, kind: output, shape index: {}]
  %s4 = sld [smem:[#allocation0]]
  $region34: #{tpu_custom_call.1} parent=0
    _
  %s6 = ssub.s32 1, %s4
  %s7 = scalar_select 0, %s6, %s4
  $region1: #{tpu_custom_call.1} parent=0
    #allocation2 [shape = 'u8[8192]{0}', space=vmem, size = 0x2000, scoped, tag = 'input window, operand 0, single buffered']
    #allocation3 [shape = 's32[1]{0}', space=sflag, size = 0x4, scoped, tag = 'scoped memory for tpu_custom_call.1']
    #allocation4 [shape = 's32[1]{0}', space=sflag, size = 0x4, scoped, tag = 'scoped memory for tpu_custom_call.1']
    #allocation5 [shape = 'u8[196608]{0}', space=vmem, size = 0x30000, scoped, tag = 'input window, operand 1, single buffered']
    #allocation6 [shape = 's32[1]{0}', space=sflag, size = 0x4, scoped, tag = 'scoped memory for tpu_custom_call.1']
    #allocation7 [shape = 'u8[196608]{0}', space=vmem, size = 0x30000, scoped, tag = 'input window, operand 2, single buffered']
    #allocation8 [shape = 'u8[8192]{0}', space=vmem, size = 0x2000, scoped, tag = 'output window, operand 0, single buffered']
    %8 = vsyncpa [#allocation3], 0
    %9 = vsyncpa [#allocation6], 0
    %10 = vsyncpa [#allocation4], 0
    // Predicated region
    $region2: #{tpu_custom_call.1} parent=1 // pred_check
      _
    $region3: #{tpu_custom_call.1} parent=1 // pred_check_branch
      %12 = sbr.rel (0) target = $region5
    $region4: #{tpu_custom_call.1} parent=1 // pred_region
      %s14 = ssub.s32 256, 256
      %15 = vsyncadd [#allocation3], %s14
      %s16 = sshll.u32 [#allocation2], 4
      %s17 = int_to_ptr.vmem [resolvable:$true] %s16
      %22 = dma.hbm_to_vmem [thread:$0]  %s0, 256, %s17, [#allocation3], 128, 128, 8
    $region5: #{tpu_custom_call.1} parent=1 // pred_fallthru
      _
    // Predicated region
    $region6: #{tpu_custom_call.1} parent=1 // pred_check
      _
    $region7: #{tpu_custom_call.1} parent=1 // pred_check_branch
      %24 = sbr.rel (0) target = $region9
    $region8: #{tpu_custom_call.1} parent=1 // pred_region
      %s26 = ssub.s32 6144, 6144
      %27 = vsyncadd [#allocation6], %s26
      %s28 = sshll.u32 [#allocation5], 4
      %s29 = int_to_ptr.vmem [resolvable:$true] %s28
      %34 = dma.hbm_to_vmem [thread:$0]  %s1, 6144, %s29, [#allocation6], 128, 128, 8
    $region9: #{tpu_custom_call.1} parent=1 // pred_fallthru
      _
    // Predicated region
    $region10: #{tpu_custom_call.1} parent=1 // pred_check
      _
    $region11: #{tpu_custom_call.1} parent=1 // pred_check_branch
      %36 = sbr.rel (0) target = $region13
    $region12: #{tpu_custom_call.1} parent=1 // pred_region
      %s38 = ssub.s32 6144, 6144
      %39 = vsyncadd [#allocation6], %s38
      %s40 = sshll.u32 [#allocation7], 4
      %s41 = int_to_ptr.vmem [resolvable:$true] %s40
      %46 = dma.hbm_to_vmem [thread:$0]  %s2, 6144, %s41, [#allocation6], 128, 128, 8
    $region13: #{tpu_custom_call.1} parent=1 // pred_fallthru
      _
    // Predicated region
    $region14: #{tpu_custom_call.1} parent=1 // pred_check
      _
    $region15: #{tpu_custom_call.1} parent=1 // pred_check_branch
      %48 = sbr.rel (0) target = $region17
    $region16: #{tpu_custom_call.1} parent=1 // pred_region
      %49 = dma.done [#allocation3], 256
    $region17: #{tpu_custom_call.1} parent=1 // pred_fallthru
      _
    // Predicated region
    $region18: #{tpu_custom_call.1} parent=1 // pred_check
      _
    $region19: #{tpu_custom_call.1} parent=1 // pred_check_branch
      %51 = sbr.rel (0) target = $region21
    $region20: #{tpu_custom_call.1} parent=1 // pred_region
      %52 = dma.done [#allocation6], 6144
    $region21: #{tpu_custom_call.1} parent=1 // pred_fallthru
      _
    // Predicated region
    $region22: #{tpu_custom_call.1} parent=1 // pred_check
      _
    $region23: #{tpu_custom_call.1} parent=1 // pred_check_branch
      %54 = sbr.rel (0) target = $region25
    $region24: #{tpu_custom_call.1} parent=1 // pred_region
      %55 = dma.done [#allocation6], 6144
    $region25: #{tpu_custom_call.1} parent=1 // pred_fallthru
      _
    %v56 = vld [vmem:[#allocation2] sm:$0xff]
    %v57 = vld [vmem:[#allocation2 + $0x8] sm:$0xff]
    %v58 = vlaneseq
    %v59 = vshrl.u32 %v58, 7
    %v60 = vadd.s32 %v59, 8
    %vm61 = vcmp.eq.s32.totalorder %v59, 0
    %vm62 = vcmp.eq.s32.totalorder %v60, 0
    %vm63 = vcmp.eq.s32.totalorder %v59, 15
    %vm64 = vcmp.eq.s32.totalorder %v60, 15
    %v65 = vrot.slane %v56, 7
    %v66 = vrot.slane %v57, 7
    %vm67 = vcmp.lt.s32.totalorder %v59, 1
    %v68 = vsel %vm67, %v65, %v66
    %v69 = vsel %vm67, %v66, %v65
    %v70 = vsel %vm61, 0.0, %v69
    %v71 = vsel %vm62, 0.0, %v68
    %v72 = vrot.slane %v56, 1
    %v73 = vrot.slane %v57, 1
    %vm74 = vcmp.lt.s32.totalorder %v59, 7
    %v75 = vsel %vm74, %v72, %v73
    %v76 = vsel %vm74, %v73, %v72
    %v77 = vsel %vm63, 0.0, %v75
    %v78 = vsel %vm64, 0.0, %v76
    %v79 = vld [vmem:[#allocation5] sm:$0xff]
    %v80 = vld [vmem:[#allocation5 + $0x8] sm:$0xff]
    %v81 = vld [vmem:[#allocation5 + $0x10] sm:$0xff]
    %v82 = vld [vmem:[#allocation5 + $0x18] sm:$0xff]
    %v83 = vld [vmem:[#allocation5 + $0x20] sm:$0xff]
    %v84 = vld [vmem:[#allocation5 + $0x28] sm:$0xff]
    %v85 = vld [vmem:[#allocation5 + $0x30] sm:$0xff]
    %v86 = vld [vmem:[#allocation5 + $0x38] sm:$0xff]
    %v87 = vld [vmem:[#allocation5 + $0x40] sm:$0xff]
    %v88 = vld [vmem:[#allocation5 + $0x48] sm:$0xff]
    %v89 = vld [vmem:[#allocation5 + $0x50] sm:$0xff]
    %v90 = vld [vmem:[#allocation5 + $0x58] sm:$0xff]
    %v91 = vld [vmem:[#allocation5 + $0x60] sm:$0xff]
    %v92 = vld [vmem:[#allocation5 + $0x68] sm:$0xff]
    %v93 = vld [vmem:[#allocation5 + $0x70] sm:$0xff]
    %v94 = vld [vmem:[#allocation5 + $0x78] sm:$0xff]
    %v95 = vld [vmem:[#allocation5 + $0x80] sm:$0xff]
    %v96 = vld [vmem:[#allocation5 + $0x88] sm:$0xff]
    %v97 = vld [vmem:[#allocation5 + $0x90] sm:$0xff]
    %v98 = vld [vmem:[#allocation5 + $0x98] sm:$0xff]
    %v99 = vld [vmem:[#allocation5 + $0xa0] sm:$0xff]
    %v100 = vld [vmem:[#allocation5 + $0xa8] sm:$0xff]
    %v101 = vld [vmem:[#allocation5 + $0xb0] sm:$0xff]
    %v102 = vld [vmem:[#allocation5 + $0xb8] sm:$0xff]
    %v103 = vld [vmem:[#allocation5 + $0xc0] sm:$0xff]
    %v104 = vld [vmem:[#allocation5 + $0xc8] sm:$0xff]
    %v105 = vld [vmem:[#allocation5 + $0xd0] sm:$0xff]
    %v106 = vld [vmem:[#allocation5 + $0xd8] sm:$0xff]
    %v107 = vld [vmem:[#allocation5 + $0xe0] sm:$0xff]
    %v108 = vld [vmem:[#allocation5 + $0xe8] sm:$0xff]
    %v109 = vld [vmem:[#allocation5 + $0xf0] sm:$0xff]
    %v110 = vld [vmem:[#allocation5 + $0xf8] sm:$0xff]
    %v111 = vld [vmem:[#allocation5 + $0x100] sm:$0xff]
    %v112 = vld [vmem:[#allocation5 + $0x108] sm:$0xff]
    %v113 = vld [vmem:[#allocation5 + $0x110] sm:$0xff]
    %v114 = vld [vmem:[#allocation5 + $0x118] sm:$0xff]
    %v115 = vld [vmem:[#allocation5 + $0x120] sm:$0xff]
    %v116 = vld [vmem:[#allocation5 + $0x128] sm:$0xff]
    %v117 = vld [vmem:[#allocation5 + $0x130] sm:$0xff]
    %v118 = vld [vmem:[#allocation5 + $0x138] sm:$0xff]
    %v119 = vld [vmem:[#allocation5 + $0x140] sm:$0xff]
    %v120 = vld [vmem:[#allocation5 + $0x148] sm:$0xff]
    %v121 = vld [vmem:[#allocation5 + $0x150] sm:$0xff]
    %v122 = vld [vmem:[#allocation5 + $0x158] sm:$0xff]
    %v123 = vld [vmem:[#allocation5 + $0x160] sm:$0xff]
    %v124 = vld [vmem:[#allocation5 + $0x168] sm:$0xff]
    %v125 = vld [vmem:[#allocation5 + $0x170] sm:$0xff]
    %v126 = vld [vmem:[#allocation5 + $0x178] sm:$0xff]
    %127 = vmatprep.subr.mxu0 0.0
    %128 = vmatpush1.msra.mxu0 %v94
    %129 = vmatprep.subr.mxu0 0.0
    %130 = vmatpush1.msra.mxu0 %v93
    %131 = vmatprep.subr.mxu0 0.0
    %132 = vmatpush1.msra.mxu0 %v92
    %133 = vmatprep.subr.mxu0 0.0
    %134 = vmatpush1.msra.mxu0 %v91
    %135 = vmatprep.subr.mxu0 0.0
    %136 = vmatpush1.msra.mxu0 %v90
    %137 = vmatprep.subr.mxu0 0.0
    %138 = vmatpush1.msra.mxu0 %v89
    %139 = vmatprep.subr.mxu0 0.0
    %140 = vmatpush1.msra.mxu0 %v88
    %141 = vmatprep.subr.mxu0 0.0
    %142 = vmatpush1.msra.mxu0 %v87
    %143 = vmatprep.subr.mxu0 0.0
    %144 = vmatpush1.msra.mxu0 %v86
    %145 = vmatprep.subr.mxu0 0.0
    %146 = vmatpush1.msra.mxu0 %v85
    %147 = vmatprep.subr.mxu0 0.0
    %148 = vmatpush1.msra.mxu0 %v84
    %149 = vmatprep.subr.mxu0 0.0
    %150 = vmatpush1.msra.mxu0 %v83
    %151 = vmatprep.subr.mxu0 0.0
    %152 = vmatpush1.msra.mxu0 %v82
    %153 = vmatprep.subr.mxu0 0.0
    %154 = vmatpush1.msra.mxu0 %v81
    %155 = vmatprep.subr.mxu0 0.0
    %156 = vmatpush1.msra.mxu0 %v80
    %157 = vmatprep.subr.mxu0 0.0
    %158 = vmatpush1.msra.mxu0 %v79
    %159 = vmatprep.subr.mxu0 0.0
    %160 = vmatpush2.msra.mxu0 %v110
    %161 = vmatprep.subr.mxu0 0.0
    %162 = vmatpush2.msra.mxu0 %v109
    %163 = vmatprep.subr.mxu0 0.0
    %164 = vmatpush2.msra.mxu0 %v108
    %165 = vmatprep.subr.mxu0 0.0
    %166 = vmatpush2.msra.mxu0 %v107
    %167 = vmatprep.subr.mxu0 0.0
    %168 = vmatpush2.msra.mxu0 %v106
    %169 = vmatprep.subr.mxu0 0.0
    %170 = vmatpush2.msra.mxu0 %v105
    %171 = vmatprep.subr.mxu0 0.0
    %172 = vmatpush2.msra.mxu0 %v104
    %173 = vmatprep.subr.mxu0 0.0
    %174 = vmatpush2.msra.mxu0 %v103
    %175 = vmatprep.subr.mxu0 0.0
    %176 = vmatpush2.msra.mxu0 %v102
    %177 = vmatprep.subr.mxu0 0.0
    %178 = vmatpush2.msra.mxu0 %v101
    %179 = vmatprep.subr.mxu0 0.0
    %180 = vmatpush2.msra.mxu0 %v100
    %181 = vmatprep.subr.mxu0 0.0
    %182 = vmatpush2.msra.mxu0 %v99
    %183 = vmatprep.subr.mxu0 0.0
    %184 = vmatpush2.msra.mxu0 %v98
    %185 = vmatprep.subr.mxu0 0.0
    %186 = vmatpush2.msra.mxu0 %v97
    %187 = vmatprep.subr.mxu0 0.0
    %188 = vmatpush2.msra.mxu0 %v96
    %189 = vmatprep.subr.mxu0 0.0
    %190 = vmatpush2.msra.mxu0 %v95
    %191 = vmatprep.mubr.f32.mxu0 %v56
    %192 = vmatmul.mubr.f32.gmra.mxu0 %v70
    %v193 = vpop.f32.mrf.mxu0
    %v194 = vadd.f32 0.0, %v193
    %v195 = vpop.f32.mrf.mxu0
    %196 = vmatprep.mubr.f32.mxu0 %v57
    %197 = vmatmul.mubr.f32.gmra.mxu0 %v71
    %v198 = vpop.f32.mrf.mxu0
    %v199 = vadd.f32 0.0, %v198
    %v200 = vpop.f32.mrf.mxu0
    %201 = vdwg.mxu0
    %202 = vmatprep.subr.mxu0 0.0
    %203 = vmatpush1.msra.mxu0 %v126
    %204 = vmatprep.subr.mxu0 0.0
    %205 = vmatpush1.msra.mxu0 %v125
    %206 = vmatprep.subr.mxu0 0.0
    %207 = vmatpush1.msra.mxu0 %v124
    %208 = vmatprep.subr.mxu0 0.0
    %209 = vmatpush1.msra.mxu0 %v123
    %210 = vmatprep.subr.mxu0 0.0
    %211 = vmatpush1.msra.mxu0 %v122
    %212 = vmatprep.subr.mxu0 0.0
    %213 = vmatpush1.msra.mxu0 %v121
    %214 = vmatprep.subr.mxu0 0.0
    %215 = vmatpush1.msra.mxu0 %v120
    %216 = vmatprep.subr.mxu0 0.0
    %217 = vmatpush1.msra.mxu0 %v119
    %218 = vmatprep.subr.mxu0 0.0
    %219 = vmatpush1.msra.mxu0 %v118
    %220 = vmatprep.subr.mxu0 0.0
    %221 = vmatpush1.msra.mxu0 %v117
    %222 = vmatprep.subr.mxu0 0.0
    %223 = vmatpush1.msra.mxu0 %v116
    %224 = vmatprep.subr.mxu0 0.0
    %225 = vmatpush1.msra.mxu0 %v115
    %226 = vmatprep.subr.mxu0 0.0
    %227 = vmatpush1.msra.mxu0 %v114
    %228 = vmatprep.subr.mxu0 0.0
    %229 = vmatpush1.msra.mxu0 %v113
    %230 = vmatprep.subr.mxu0 0.0
    %231 = vmatpush1.msra.mxu0 %v112
    %232 = vmatprep.subr.mxu0 0.0
    %233 = vmatpush1.msra.mxu0 %v111
    %234 = vmatprep.subr.mxu0 0.0
    %235 = vmatpush2.msra.mxu0 0.0
    %236 = vmatprep.subr.mxu0 0.0
    %237 = vmatpush2.msra.mxu0 0.0
    %238 = vmatprep.subr.mxu0 0.0
    %239 = vmatpush2.msra.mxu0 0.0
    %240 = vmatprep.subr.mxu0 0.0
    %241 = vmatpush2.msra.mxu0 0.0
    %242 = vmatprep.subr.mxu0 0.0
    %243 = vmatpush2.msra.mxu0 0.0
    %244 = vmatprep.subr.mxu0 0.0
    %245 = vmatpush2.msra.mxu0 0.0
    %246 = vmatprep.subr.mxu0 0.0
    %247 = vmatpush2.msra.mxu0 0.0
    %248 = vmatprep.subr.mxu0 0.0
    %249 = vmatpush2.msra.mxu0 0.0
    %250 = vmatprep.subr.mxu0 0.0
    %251 = vmatpush2.msra.mxu0 0.0
    %252 = vmatprep.subr.mxu0 0.0
    %253 = vmatpush2.msra.mxu0 0.0
    %254 = vmatprep.subr.mxu0 0.0
    %255 = vmatpush2.msra.mxu0 0.0
    %256 = vmatprep.subr.mxu0 0.0
    %257 = vmatpush2.msra.mxu0 0.0
    %258 = vmatprep.subr.mxu0 0.0
    %259 = vmatpush2.msra.mxu0 0.0
    %260 = vmatprep.subr.mxu0 0.0
    %261 = vmatpush2.msra.mxu0 0.0
    %262 = vmatprep.subr.mxu0 0.0
    %263 = vmatpush2.msra.mxu0 0.0
    %264 = vmatprep.subr.mxu0 0.0
    %265 = vmatpush2.msra.mxu0 0.0
    %266 = vmatprep.mubr.f32.mxu0 0.0
    %267 = vmatmul.mubr.f32.gmra.mxu0 %v77
    %v268 = vpop.f32.mrf.mxu0
    %v269 = vadd.f32 %v194, %v268
    %v270 = vpop.f32.mrf.mxu0
    %271 = vmatprep.mubr.f32.mxu0 0.0
    %272 = vmatmul.mubr.f32.gmra.mxu0 %v78
    %v273 = vpop.f32.mrf.mxu0
    %v274 = vadd.f32 %v199, %v273
    %v275 = vpop.f32.mrf.mxu0
    %276 = vdwg.mxu0
    %v277 = vmax.f32 %v269, 0.0
    %v278 = vmax.f32 %v274, 0.0
    %v279 = vrot.slane %v277, 7
    %v280 = vrot.slane %v278, 7
    %v281 = vsel %vm67, %v279, %v280
    %v282 = vsel %vm67, %v280, %v279
    %v283 = vsel %vm61, 0.0, %v282
    %v284 = vsel %vm62, 0.0, %v281
    %v285 = vrot.slane %v277, 1
    %v286 = vrot.slane %v278, 1
    %v287 = vsel %vm74, %v285, %v286
    %v288 = vsel %vm74, %v286, %v285
    %v289 = vsel %vm63, 0.0, %v287
    %v290 = vsel %vm64, 0.0, %v288
    %v291 = vld [vmem:[#allocation7] sm:$0xff]
    %v292 = vld [vmem:[#allocation7 + $0x8] sm:$0xff]
    %v293 = vld [vmem:[#allocation7 + $0x10] sm:$0xff]
    %v294 = vld [vmem:[#allocation7 + $0x18] sm:$0xff]
    %v295 = vld [vmem:[#allocation7 + $0x20] sm:$0xff]
    %v296 = vld [vmem:[#allocation7 + $0x28] sm:$0xff]
    %v297 = vld [vmem:[#allocation7 + $0x30] sm:$0xff]
    %v298 = vld [vmem:[#allocation7 + $0x38] sm:$0xff]
    %v299 = vld [vmem:[#allocation7 + $0x40] sm:$0xff]
    %v300 = vld [vmem:[#allocation7 + $0x48] sm:$0xff]
    %v301 = vld [vmem:[#allocation7 + $0x50] sm:$0xff]
    %v302 = vld [vmem:[#allocation7 + $0x58] sm:$0xff]
    %v303 = vld [vmem:[#allocation7 + $0x60] sm:$0xff]
    %v304 = vld [vmem:[#allocation7 + $0x68] sm:$0xff]
    %v305 = vld [vmem:[#allocation7 + $0x70] sm:$0xff]
    %v306 = vld [vmem:[#allocation7 + $0x78] sm:$0xff]
    %v307 = vld [vmem:[#allocation7 + $0x80] sm:$0xff]
    %v308 = vld [vmem:[#allocation7 + $0x88] sm:$0xff]
    %v309 = vld [vmem:[#allocation7 + $0x90] sm:$0xff]
    %v310 = vld [vmem:[#allocation7 + $0x98] sm:$0xff]
    %v311 = vld [vmem:[#allocation7 + $0xa0] sm:$0xff]
    %v312 = vld [vmem:[#allocation7 + $0xa8] sm:$0xff]
    %v313 = vld [vmem:[#allocation7 + $0xb0] sm:$0xff]
    %v314 = vld [vmem:[#allocation7 + $0xb8] sm:$0xff]
    %v315 = vld [vmem:[#allocation7 + $0xc0] sm:$0xff]
    %v316 = vld [vmem:[#allocation7 + $0xc8] sm:$0xff]
    %v317 = vld [vmem:[#allocation7 + $0xd0] sm:$0xff]
    %v318 = vld [vmem:[#allocation7 + $0xd8] sm:$0xff]
    %v319 = vld [vmem:[#allocation7 + $0xe0] sm:$0xff]
    %v320 = vld [vmem:[#allocation7 + $0xe8] sm:$0xff]
    %v321 = vld [vmem:[#allocation7 + $0xf0] sm:$0xff]
    %v322 = vld [vmem:[#allocation7 + $0xf8] sm:$0xff]
    %v323 = vld [vmem:[#allocation7 + $0x100] sm:$0xff]
    %v324 = vld [vmem:[#allocation7 + $0x108] sm:$0xff]
    %v325 = vld [vmem:[#allocation7 + $0x110] sm:$0xff]
    %v326 = vld [vmem:[#allocation7 + $0x118] sm:$0xff]
    %v327 = vld [vmem:[#allocation7 + $0x120] sm:$0xff]
    %v328 = vld [vmem:[#allocation7 + $0x128] sm:$0xff]
    %v329 = vld [vmem:[#allocation7 + $0x130] sm:$0xff]
    %v330 = vld [vmem:[#allocation7 + $0x138] sm:$0xff]
    %v331 = vld [vmem:[#allocation7 + $0x140] sm:$0xff]
    %v332 = vld [vmem:[#allocation7 + $0x148] sm:$0xff]
    %v333 = vld [vmem:[#allocation7 + $0x150] sm:$0xff]
    %v334 = vld [vmem:[#allocation7 + $0x158] sm:$0xff]
    %v335 = vld [vmem:[#allocation7 + $0x160] sm:$0xff]
    %v336 = vld [vmem:[#allocation7 + $0x168] sm:$0xff]
    %v337 = vld [vmem:[#allocation7 + $0x170] sm:$0xff]
    %v338 = vld [vmem:[#allocation7 + $0x178] sm:$0xff]
    %339 = vmatprep.subr.mxu0 0.0
    %340 = vmatpush1.msra.mxu0 %v306
    %341 = vmatprep.subr.mxu0 0.0
    %342 = vmatpush1.msra.mxu0 %v305
    %343 = vmatprep.subr.mxu0 0.0
    %344 = vmatpush1.msra.mxu0 %v304
    %345 = vmatprep.subr.mxu0 0.0
    %346 = vmatpush1.msra.mxu0 %v303
    %347 = vmatprep.subr.mxu0 0.0
    %348 = vmatpush1.msra.mxu0 %v302
    %349 = vmatprep.subr.mxu0 0.0
    %350 = vmatpush1.msra.mxu0 %v301
    %351 = vmatprep.subr.mxu0 0.0
    %352 = vmatpush1.msra.mxu0 %v300
    %353 = vmatprep.subr.mxu0 0.0
    %354 = vmatpush1.msra.mxu0 %v299
    %355 = vmatprep.subr.mxu0 0.0
    %356 = vmatpush1.msra.mxu0 %v298
    %357 = vmatprep.subr.mxu0 0.0
    %358 = vmatpush1.msra.mxu0 %v297
    %359 = vmatprep.subr.mxu0 0.0
    %360 = vmatpush1.msra.mxu0 %v296
    %361 = vmatprep.subr.mxu0 0.0
    %362 = vmatpush1.msra.mxu0 %v295
    %363 = vmatprep.subr.mxu0 0.0
    %364 = vmatpush1.msra.mxu0 %v294
    %365 = vmatprep.subr.mxu0 0.0
    %366 = vmatpush1.msra.mxu0 %v293
    %367 = vmatprep.subr.mxu0 0.0
    %368 = vmatpush1.msra.mxu0 %v292
    %369 = vmatprep.subr.mxu0 0.0
    %370 = vmatpush1.msra.mxu0 %v291
    %371 = vmatprep.subr.mxu0 0.0
    %372 = vmatpush2.msra.mxu0 %v322
    %373 = vmatprep.subr.mxu0 0.0
    %374 = vmatpush2.msra.mxu0 %v321
    %375 = vmatprep.subr.mxu0 0.0
    %376 = vmatpush2.msra.mxu0 %v320
    %377 = vmatprep.subr.mxu0 0.0
    %378 = vmatpush2.msra.mxu0 %v319
    %379 = vmatprep.subr.mxu0 0.0
    %380 = vmatpush2.msra.mxu0 %v318
    %381 = vmatprep.subr.mxu0 0.0
    %382 = vmatpush2.msra.mxu0 %v317
    %383 = vmatprep.subr.mxu0 0.0
    %384 = vmatpush2.msra.mxu0 %v316
    %385 = vmatprep.subr.mxu0 0.0
    %386 = vmatpush2.msra.mxu0 %v315
    %387 = vmatprep.subr.mxu0 0.0
    %388 = vmatpush2.msra.mxu0 %v314
    %389 = vmatprep.subr.mxu0 0.0
    %390 = vmatpush2.msra.mxu0 %v313
    %391 = vmatprep.subr.mxu0 0.0
    %392 = vmatpush2.msra.mxu0 %v312
    %393 = vmatprep.subr.mxu0 0.0
    %394 = vmatpush2.msra.mxu0 %v311
    %395 = vmatprep.subr.mxu0 0.0
    %396 = vmatpush2.msra.mxu0 %v310
    %397 = vmatprep.subr.mxu0 0.0
    %398 = vmatpush2.msra.mxu0 %v309
    %399 = vmatprep.subr.mxu0 0.0
    %400 = vmatpush2.msra.mxu0 %v308
    %401 = vmatprep.subr.mxu0 0.0
    %402 = vmatpush2.msra.mxu0 %v307
    %403 = vmatprep.mubr.f32.mxu0 %v277
    %404 = vmatmul.mubr.f32.gmra.mxu0 %v283
    %v405 = vpop.f32.mrf.mxu0
    %v406 = vadd.f32 %v56, %v405
    %v407 = vpop.f32.mrf.mxu0
    %408 = vmatprep.mubr.f32.mxu0 %v278
    %409 = vmatmul.mubr.f32.gmra.mxu0 %v284
    %v410 = vpop.f32.mrf.mxu0
    %v411 = vadd.f32 %v57, %v410
    %v412 = vpop.f32.mrf.mxu0
    %413 = vdwg.mxu0
    %414 = vmatprep.subr.mxu0 0.0
    %415 = vmatpush1.msra.mxu0 %v338
    %416 = vmatprep.subr.mxu0 0.0
    %417 = vmatpush1.msra.mxu0 %v337
    %418 = vmatprep.subr.mxu0 0.0
    %419 = vmatpush1.msra.mxu0 %v336
    %420 = vmatprep.subr.mxu0 0.0
    %421 = vmatpush1.msra.mxu0 %v335
    %422 = vmatprep.subr.mxu0 0.0
    %423 = vmatpush1.msra.mxu0 %v334
    %424 = vmatprep.subr.mxu0 0.0
    %425 = vmatpush1.msra.mxu0 %v333
    %426 = vmatprep.subr.mxu0 0.0
    %427 = vmatpush1.msra.mxu0 %v332
    %428 = vmatprep.subr.mxu0 0.0
    %429 = vmatpush1.msra.mxu0 %v331
    %430 = vmatprep.subr.mxu0 0.0
    %431 = vmatpush1.msra.mxu0 %v330
    %432 = vmatprep.subr.mxu0 0.0
    %433 = vmatpush1.msra.mxu0 %v329
    %434 = vmatprep.subr.mxu0 0.0
    %435 = vmatpush1.msra.mxu0 %v328
    %436 = vmatprep.subr.mxu0 0.0
    %437 = vmatpush1.msra.mxu0 %v327
    %438 = vmatprep.subr.mxu0 0.0
    %439 = vmatpush1.msra.mxu0 %v326
    %440 = vmatprep.subr.mxu0 0.0
    %441 = vmatpush1.msra.mxu0 %v325
    %442 = vmatprep.subr.mxu0 0.0
    %443 = vmatpush1.msra.mxu0 %v324
    %444 = vmatprep.subr.mxu0 0.0
    %445 = vmatpush1.msra.mxu0 %v323
    %446 = vmatprep.subr.mxu0 0.0
    %447 = vmatpush2.msra.mxu0 0.0
    %448 = vmatprep.subr.mxu0 0.0
    %449 = vmatpush2.msra.mxu0 0.0
    %450 = vmatprep.subr.mxu0 0.0
    %451 = vmatpush2.msra.mxu0 0.0
    %452 = vmatprep.subr.mxu0 0.0
    %453 = vmatpush2.msra.mxu0 0.0
    %454 = vmatprep.subr.mxu0 0.0
    %455 = vmatpush2.msra.mxu0 0.0
    %456 = vmatprep.subr.mxu0 0.0
    %457 = vmatpush2.msra.mxu0 0.0
    %458 = vmatprep.subr.mxu0 0.0
    %459 = vmatpush2.msra.mxu0 0.0
    %460 = vmatprep.subr.mxu0 0.0
    %461 = vmatpush2.msra.mxu0 0.0
    %462 = vmatprep.subr.mxu0 0.0
    %463 = vmatpush2.msra.mxu0 0.0
    %464 = vmatprep.subr.mxu0 0.0
    %465 = vmatpush2.msra.mxu0 0.0
    %466 = vmatprep.subr.mxu0 0.0
    %467 = vmatpush2.msra.mxu0 0.0
    %468 = vmatprep.subr.mxu0 0.0
    %469 = vmatpush2.msra.mxu0 0.0
    %470 = vmatprep.subr.mxu0 0.0
    %471 = vmatpush2.msra.mxu0 0.0
    %472 = vmatprep.subr.mxu0 0.0
    %473 = vmatpush2.msra.mxu0 0.0
    %474 = vmatprep.subr.mxu0 0.0
    %475 = vmatpush2.msra.mxu0 0.0
    %476 = vmatprep.subr.mxu0 0.0
    %477 = vmatpush2.msra.mxu0 0.0
    %478 = vmatprep.mubr.f32.mxu0 0.0
    %479 = vmatmul.mubr.f32.gmra.mxu0 %v289
    %v480 = vpop.f32.mrf.mxu0
    %v481 = vadd.f32 %v406, %v480
    %v482 = vpop.f32.mrf.mxu0
    %483 = vmatprep.mubr.f32.mxu0 0.0
    %484 = vmatmul.mubr.f32.gmra.mxu0 %v290
    %v485 = vpop.f32.mrf.mxu0
    %v486 = vadd.f32 %v411, %v485
    %v487 = vpop.f32.mrf.mxu0
    %488 = vdwg.mxu0
    %v489 = vmax.f32 %v481, 0.0
    %v490 = vmax.f32 %v486, 0.0
    %491 = vst [vmem:[#allocation8] sm:$0xff] %v489
    %492 = vst [vmem:[#allocation8 + $0x8] sm:$0xff] %v490
    // Predicated region
    $region26: #{tpu_custom_call.1} parent=1 // pred_check
      _
    $region27: #{tpu_custom_call.1} parent=1 // pred_check_branch
      %494 = sbr.rel (0) target = $region29
    $region28: #{tpu_custom_call.1} parent=1 // pred_region
      %s496 = ssub.s32 256, 256
      %497 = vsyncadd [#allocation4], %s496
      %s498 = sshll.u32 [#allocation8], 4
      %s499 = int_to_ptr.vmem [resolvable:$true] %s498
      %504 = dma.vmem_to_hbm [thread:$0]  %s499, 256, %s3, [#allocation4], 128, 128, 8
    $region29: #{tpu_custom_call.1} parent=1 // pred_fallthru
      _
    // Predicated region
    $region30: #{tpu_custom_call.1} parent=1 // pred_check
      _
    $region31: #{tpu_custom_call.1} parent=1 // pred_check_branch
      %506 = sbr.rel (0) target = $region33
    $region32: #{tpu_custom_call.1} parent=1 // pred_region
      %507 = dma.done [#allocation4], 256
    $region33: #{tpu_custom_call.1} parent=1 // pred_fallthru
      _
    %508 = vsyncpa [#allocation3], 1
    %509 = vsyncpa [#allocation6], 1
    %510 = vsyncpa [#allocation4], 1

</llo_original>
